<compile_context>
chip_gen: v6e
topology: v6e:2x2x1
jax: 0.10.0
libtpu: 0.0.40
codegen_flags: <defaults>
</compile_context>

<pallas_src>
import functools

import jax
import jax.numpy as jnp
from jax.experimental import pallas as pl
from jax.experimental.pallas import tpu as pltpu


def _spatial_gate_kernel(w_ref, b_ref, mask_ref, x_ref, o_ref, buf_ref, *, C, H, W):
    # w_ref   : SMEM (C*9,)          flipped 3x3 weights, layout [c*9 + kh*3 + kw]
    # b_ref   : SMEM (1,)            bias
    # mask_ref: VMEM (9, 1, H*W)     per-tap border validity (1.0 in-image else 0.0)
    # x_ref   : VMEM (NB, C*H*W)     flattened input chunk (lane axis = C*H*W)
    # o_ref   : VMEM (NB, H*W)       sigmoid(conv) output chunk
    # buf_ref : VMEM (NB, H*W+2*pad) lane-padded staging buffer for shifted taps
    HW = H * W
    nb = o_ref.shape[0]
    pad = (buf_ref.shape[1] - HW) // 2

    # Border of the staging buffer must be finite: it is masked out below, but
    # 0 * NaN (uninitialized VMEM) would poison the accumulator.
    buf_ref[...] = jnp.zeros(buf_ref.shape, buf_ref.dtype)

    # Load each channel slab once (f32); reused by all nine taps.  The slice
    # offsets c*HW are lane-aligned when HW is a multiple of 128.
    xs = [x_ref[:, c * HW:(c + 1) * HW].astype(jnp.float32) for c in range(C)]

    acc = jnp.zeros((nb, HW), jnp.float32)
    for kh in range(3):
        for kw in range(3):
            t = kh * 3 + kw
            # Channel contraction: scalar weight from SMEM * vector slab MACs.
            tap = xs[0] * w_ref[t]
            for c in range(1, C):
                tap = tap + xs[c] * w_ref[c * 9 + t]
            off = (kh - 1) * W + (kw - 1)          # flat spatial offset of this tap
            if off == 0:
                acc = acc + tap                     # centre tap: no shift, no mask
            else:
                # shifted[p] = tap[p + off]; positions whose source falls outside
                # the image are zeroed by the mask.
                buf_ref[:, pad:pad + HW] = tap
                shifted = buf_ref[:, pad + off:pad + off + HW]
                acc = acc + shifted * mask_ref[t]
    o_ref[...] = jax.nn.sigmoid(acc + b_ref[0]).astype(o_ref.dtype)


def _border_masks(H, W):
    """(9, 1, H*W) float32; mask[t, 0, p] == 1 iff tap t's read at p stays in-image."""
    hh = jnp.arange(H)[:, None]
    ww = jnp.arange(W)[None, :]
    rows = []
    for kh in range(3):
        for kw in range(3):
            dh, dw = kh - 1, kw - 1
            ok = ((hh + dh >= 0) & (hh + dh < H) &
                  (ww + dw >= 0) & (ww + dw < W))
            rows.append(ok.reshape(1, H * W))
    return jnp.stack(rows, axis=0).astype(jnp.float32)


def _pick_batch_block(n, per_image_bytes, target_bytes):
    """Batch-chunk size: as large as fits the byte target while staying legal
    under the (8,128) block rule (chunk == N or a multiple of 8); prefer >=2
    grid steps so both v7x TensorCores see work."""
    legal = [d for d in range(1, n + 1) if n % d == 0 and (d == n or d % 8 == 0)]
    fitting = [d for d in legal if d * per_image_bytes <= target_bytes] or [min(legal)]
    multi = [d for d in fitting if n // d >= 2]
    return max(multi) if multi else max(fitting)


def spatial_gate(x, wt, bias, *, target_block_bytes=512 * 1024):
    """SpatialGate forward: sigmoid(ConvTranspose2d(C->1, k=3, s=1, p=1)(x)).

    x: (N, C, H, W); wt: ConvTranspose2d weight (C, 1, 3, 3); bias: (1,).
    """
    N, C, H, W = x.shape
    HW = H * W

    # ConvTranspose2d(stride=1, padding=1) == 'same' conv with flipped weights.
    w_flat = wt[:, 0, ::-1, ::-1].reshape(C * 9).astype(jnp.float32)   # [c*9+kh*3+kw]
    b = bias.reshape(1).astype(jnp.float32)
    masks = _border_masks(H, W)                                        # (9, 1, HW)

    # Free, contiguous reshape: no padded copy of x materialized in HBM.
    x_flat = x.reshape(N, C * HW)

    nb = _pick_batch_block(N, C * HW * x.dtype.itemsize, target_block_bytes)
    grid = (N // nb,)
    pad = -(-(W + 1) // 128) * 128        # lane-aligned halo >= largest tap shift

    kernel = functools.partial(_spatial_gate_kernel, C=C, H=H, W=W)
    out = pl.pallas_call(
        kernel,
        out_shape=jax.ShapeDtypeStruct((N, HW), x.dtype),
        grid=grid,
        in_specs=[
            pl.BlockSpec(memory_space=pltpu.MemorySpace.SMEM),     # weights (scalars)
            pl.BlockSpec(memory_space=pltpu.MemorySpace.SMEM),     # bias (scalar)
            pl.BlockSpec((9, 1, HW), lambda n: (0, 0, 0)),         # masks (resident)
            pl.BlockSpec((nb, C * HW), lambda n: (n, 0)),          # input chunk
        ],
        out_specs=pl.BlockSpec((nb, HW), lambda n: (n, 0)),
        scratch_shapes=[pltpu.VMEM((nb, HW + 2 * pad), jnp.float32)],
        compiler_params=pltpu.CompilerParams(
            dimension_semantics=("parallel",)),
    )(w_flat, b, masks, x_flat)

    return out.reshape(N, 1, H, W)


def _reference(x, wt, bias):
    """Pure-JAX reference: flipped-kernel 'same' conv + sigmoid."""
    w_conv = jnp.transpose(wt[:, :, ::-1, ::-1], (1, 0, 2, 3))  # (1, C, 3, 3)
    y = jax.lax.conv_general_dilated(
        x, w_conv, window_strides=(1, 1), padding=((1, 1), (1, 1)),
        dimension_numbers=("NCHW", "OIHW", "NCHW"))
    return jax.nn.sigmoid(y + bias.reshape(1, 1, 1, 1))


if __name__ == "__main__":
    key = jax.random.PRNGKey(0)
    kx, kw, kb = jax.random.split(key, 3)

    N, C, H, W = 2, 4, 16, 16
    x = jax.random.normal(kx, (N, C, H, W), dtype=jnp.float32)

    # ConvTranspose2d(C, 1, kernel_size=3) parameters: weight (C, 1, 3, 3), bias (1,).
    fan = C * 3 * 3
    bound = 1.0 / (fan ** 0.5)
    wt = jax.random.uniform(kw, (C, 1, 3, 3), jnp.float32, -bound, bound)
    bias = jax.random.uniform(kb, (1,), jnp.float32, -bound, bound)

    out = jax.block_until_ready(spatial_gate(x, wt, bias))
    ref = _reference(x, wt, bias)

    assert out.shape == (N, 1, H, W)
    assert jnp.allclose(out, ref, atol=1e-5, rtol=1e-5), (
        float(jnp.max(jnp.abs(out - ref))))

    print("KERNEL_OK")
</pallas_src>

<mosaic_0001>
module attributes {stable_mosaic.version = 11 : i64} {
  func.func @_spatial_gate_kernel(%arg0: i32, %arg1: memref<36xf32, #tpu.memory_space<smem>>, %arg2: memref<1xf32, #tpu.memory_space<smem>>, %arg3: memref<9x1x256xf32, #tpu.memory_space<vmem>>, %arg4: memref<2x1024xf32, #tpu.memory_space<vmem>>, %arg5: memref<2x256xf32, #tpu.memory_space<vmem>>, %arg6: memref<2x512xf32, #tpu.memory_space<vmem>>) attributes {dimension_semantics = [#tpu.dimension_semantics<parallel>], iteration_bounds = array<i64: 1>, scalar_prefetch = 0 : i64, scratch_operands = 1 : i64, tpu.core_type = #tpu.core_type<tc>, window_params = [{transform_indices = @transform_0, window_bounds = array<i64: 36>}, {transform_indices = @transform_1, window_bounds = array<i64: 1>}, {pipeline_mode = #tpu.pipeline_mode<synchronous>, transform_indices = @transform_2, window_bounds = array<i64: 9, 1, 256>}, {transform_indices = @transform_3, window_bounds = array<i64: 2, 1024>}, {transform_indices = @transform_4, window_bounds = array<i64: 2, 256>}]} {
    %cst = arith.constant 0.000000e+00 : f32
    %0 = vector.broadcast %cst : f32 to vector<2x512xf32>
    %c0 = arith.constant 0 : index
    %c0_0 = arith.constant 0 : index
    %1 = vector.load %arg6[%c0, %c0_0] : memref<2x512xf32, #tpu.memory_space<vmem>>, vector<2x512xf32>
    tpu.vector_store %arg6[%c0, %c0_0], %0 {strides = array<i32>} : memref<2x512xf32, #tpu.memory_space<vmem>>, vector<2x512xf32>,
    %c0_1 = arith.constant 0 : index
    %c0_2 = arith.constant 0 : index
    %2 = vector.load %arg4[%c0_1, %c0_2] : memref<2x1024xf32, #tpu.memory_space<vmem>>, vector<2x256xf32>
    %c0_3 = arith.constant 0 : index
    %c256 = arith.constant 256 : index
    %3 = vector.load %arg4[%c0_3, %c256] : memref<2x1024xf32, #tpu.memory_space<vmem>>, vector<2x256xf32>
    %c0_4 = arith.constant 0 : index
    %c512 = arith.constant 512 : index
    %4 = vector.load %arg4[%c0_4, %c512] : memref<2x1024xf32, #tpu.memory_space<vmem>>, vector<2x256xf32>
    %c0_5 = arith.constant 0 : index
    %c768 = arith.constant 768 : index
    %5 = vector.load %arg4[%c0_5, %c768] : memref<2x1024xf32, #tpu.memory_space<vmem>>, vector<2x256xf32>
    %cst_6 = arith.constant 0.000000e+00 : f32
    %6 = vector.broadcast %cst_6 : f32 to vector<2x256xf32>
    %c0_7 = arith.constant 0 : index
    %7 = memref.load %arg1[%c0_7] : memref<36xf32, #tpu.memory_space<smem>>
    %8 = vector.broadcast %7 : f32 to vector<2x256xf32>
    %9 = arith.mulf %2, %8 : vector<2x256xf32>
    %c9 = arith.constant 9 : index
    %10 = memref.load %arg1[%c9] : memref<36xf32, #tpu.memory_space<smem>>
    %11 = vector.broadcast %10 : f32 to vector<2x256xf32>
    %12 = arith.mulf %3, %11 : vector<2x256xf32>
    %13 = arith.addf %9, %12 : vector<2x256xf32>
    %c18 = arith.constant 18 : index
    %14 = memref.load %arg1[%c18] : memref<36xf32, #tpu.memory_space<smem>>
    %15 = vector.broadcast %14 : f32 to vector<2x256xf32>
    %16 = arith.mulf %4, %15 : vector<2x256xf32>
    %17 = arith.addf %13, %16 : vector<2x256xf32>
    %c27 = arith.constant 27 : index
    %18 = memref.load %arg1[%c27] : memref<36xf32, #tpu.memory_space<smem>>
    %19 = vector.broadcast %18 : f32 to vector<2x256xf32>
    %20 = arith.mulf %5, %19 : vector<2x256xf32>
    %21 = arith.addf %17, %20 : vector<2x256xf32>
    %c0_8 = arith.constant 0 : index
    %c128 = arith.constant 128 : index
    %22 = vector.load %arg6[%c0_8, %c128] : memref<2x512xf32, #tpu.memory_space<vmem>>, vector<2x256xf32>
    tpu.vector_store %arg6[%c0_8, %c128], %21 {strides = array<i32>} : memref<2x512xf32, #tpu.memory_space<vmem>>, vector<2x256xf32>,
    %c0_9 = arith.constant 0 : index
    %c111 = arith.constant 111 : index
    %23 = vector.load %arg6[%c0_9, %c111] : memref<2x512xf32, #tpu.memory_space<vmem>>, vector<2x256xf32>
    %c0_10 = arith.constant 0 : index
    %c0_11 = arith.constant 0 : index
    %c0_12 = arith.constant 0 : index
    %24 = vector.load %arg3[%c0_10, %c0_11, %c0_12] : memref<9x1x256xf32, #tpu.memory_space<vmem>>, vector<1x1x256xf32>
    %25 = vector.shape_cast %24 : vector<1x1x256xf32> to vector<1x256xf32>
    %26 = vector.broadcast %25 : vector<1x256xf32> to vector<2x256xf32>
    %27 = arith.mulf %23, %26 : vector<2x256xf32>
    %28 = arith.addf %6, %27 : vector<2x256xf32>
    %c1 = arith.constant 1 : index
    %29 = memref.load %arg1[%c1] : memref<36xf32, #tpu.memory_space<smem>>
    %30 = vector.broadcast %29 : f32 to vector<2x256xf32>
    %31 = arith.mulf %2, %30 : vector<2x256xf32>
    %c10 = arith.constant 10 : index
    %32 = memref.load %arg1[%c10] : memref<36xf32, #tpu.memory_space<smem>>
    %33 = vector.broadcast %32 : f32 to vector<2x256xf32>
    %34 = arith.mulf %3, %33 : vector<2x256xf32>
    %35 = arith.addf %31, %34 : vector<2x256xf32>
    %c19 = arith.constant 19 : index
    %36 = memref.load %arg1[%c19] : memref<36xf32, #tpu.memory_space<smem>>
    %37 = vector.broadcast %36 : f32 to vector<2x256xf32>
    %38 = arith.mulf %4, %37 : vector<2x256xf32>
    %39 = arith.addf %35, %38 : vector<2x256xf32>
    %c28 = arith.constant 28 : index
    %40 = memref.load %arg1[%c28] : memref<36xf32, #tpu.memory_space<smem>>
    %41 = vector.broadcast %40 : f32 to vector<2x256xf32>
    %42 = arith.mulf %5, %41 : vector<2x256xf32>
    %43 = arith.addf %39, %42 : vector<2x256xf32>
    %c0_13 = arith.constant 0 : index
    %c128_14 = arith.constant 128 : index
    %44 = vector.load %arg6[%c0_13, %c128_14] : memref<2x512xf32, #tpu.memory_space<vmem>>, vector<2x256xf32>
    tpu.vector_store %arg6[%c0_13, %c128_14], %43 {strides = array<i32>} : memref<2x512xf32, #tpu.memory_space<vmem>>, vector<2x256xf32>,
    %c0_15 = arith.constant 0 : index
    %c112 = arith.constant 112 : index
    %45 = vector.load %arg6[%c0_15, %c112] : memref<2x512xf32, #tpu.memory_space<vmem>>, vector<2x256xf32>
    %c1_16 = arith.constant 1 : index
    %c0_17 = arith.constant 0 : index
    %c0_18 = arith.constant 0 : index
    %46 = vector.load %arg3[%c1_16, %c0_17, %c0_18] : memref<9x1x256xf32, #tpu.memory_space<vmem>>, vector<1x1x256xf32>
    %47 = vector.shape_cast %46 : vector<1x1x256xf32> to vector<1x256xf32>
    %48 = vector.broadcast %47 : vector<1x256xf32> to vector<2x256xf32>
    %49 = arith.mulf %45, %48 : vector<2x256xf32>
    %50 = arith.addf %28, %49 : vector<2x256xf32>
    %c2 = arith.constant 2 : index
    %51 = memref.load %arg1[%c2] : memref<36xf32, #tpu.memory_space<smem>>
    %52 = vector.broadcast %51 : f32 to vector<2x256xf32>
    %53 = arith.mulf %2, %52 : vector<2x256xf32>
    %c11 = arith.constant 11 : index
    %54 = memref.load %arg1[%c11] : memref<36xf32, #tpu.memory_space<smem>>
    %55 = vector.broadcast %54 : f32 to vector<2x256xf32>
    %56 = arith.mulf %3, %55 : vector<2x256xf32>
    %57 = arith.addf %53, %56 : vector<2x256xf32>
    %c20 = arith.constant 20 : index
    %58 = memref.load %arg1[%c20] : memref<36xf32, #tpu.memory_space<smem>>
    %59 = vector.broadcast %58 : f32 to vector<2x256xf32>
    %60 = arith.mulf %4, %59 : vector<2x256xf32>
    %61 = arith.addf %57, %60 : vector<2x256xf32>
    %c29 = arith.constant 29 : index
    %62 = memref.load %arg1[%c29] : memref<36xf32, #tpu.memory_space<smem>>
    %63 = vector.broadcast %62 : f32 to vector<2x256xf32>
    %64 = arith.mulf %5, %63 : vector<2x256xf32>
    %65 = arith.addf %61, %64 : vector<2x256xf32>
    %c0_19 = arith.constant 0 : index
    %c128_20 = arith.constant 128 : index
    %66 = vector.load %arg6[%c0_19, %c128_20] : memref<2x512xf32, #tpu.memory_space<vmem>>, vector<2x256xf32>
    tpu.vector_store %arg6[%c0_19, %c128_20], %65 {strides = array<i32>} : memref<2x512xf32, #tpu.memory_space<vmem>>, vector<2x256xf32>,
    %c0_21 = arith.constant 0 : index
    %c113 = arith.constant 113 : index
    %67 = vector.load %arg6[%c0_21, %c113] : memref<2x512xf32, #tpu.memory_space<vmem>>, vector<2x256xf32>
    %c2_22 = arith.constant 2 : index
    %c0_23 = arith.constant 0 : index
    %c0_24 = arith.constant 0 : index
    %68 = vector.load %arg3[%c2_22, %c0_23, %c0_24] : memref<9x1x256xf32, #tpu.memory_space<vmem>>, vector<1x1x256xf32>
    %69 = vector.shape_cast %68 : vector<1x1x256xf32> to vector<1x256xf32>
    %70 = vector.broadcast %69 : vector<1x256xf32> to vector<2x256xf32>
    %71 = arith.mulf %67, %70 : vector<2x256xf32>
    %72 = arith.addf %50, %71 : vector<2x256xf32>
    %c3 = arith.constant 3 : index
    %73 = memref.load %arg1[%c3] : memref<36xf32, #tpu.memory_space<smem>>
    %74 = vector.broadcast %73 : f32 to vector<2x256xf32>
    %75 = arith.mulf %2, %74 : vector<2x256xf32>
    %c12 = arith.constant 12 : index
    %76 = memref.load %arg1[%c12] : memref<36xf32, #tpu.memory_space<smem>>
    %77 = vector.broadcast %76 : f32 to vector<2x256xf32>
    %78 = arith.mulf %3, %77 : vector<2x256xf32>
    %79 = arith.addf %75, %78 : vector<2x256xf32>
    %c21 = arith.constant 21 : index
    %80 = memref.load %arg1[%c21] : memref<36xf32, #tpu.memory_space<smem>>
    %81 = vector.broadcast %80 : f32 to vector<2x256xf32>
    %82 = arith.mulf %4, %81 : vector<2x256xf32>
    %83 = arith.addf %79, %82 : vector<2x256xf32>
    %c30 = arith.constant 30 : index
    %84 = memref.load %arg1[%c30] : memref<36xf32, #tpu.memory_space<smem>>
    %85 = vector.broadcast %84 : f32 to vector<2x256xf32>
    %86 = arith.mulf %5, %85 : vector<2x256xf32>
    %87 = arith.addf %83, %86 : vector<2x256xf32>
    %c0_25 = arith.constant 0 : index
    %c128_26 = arith.constant 128 : index
    %88 = vector.load %arg6[%c0_25, %c128_26] : memref<2x512xf32, #tpu.memory_space<vmem>>, vector<2x256xf32>
    tpu.vector_store %arg6[%c0_25, %c128_26], %87 {strides = array<i32>} : memref<2x512xf32, #tpu.memory_space<vmem>>, vector<2x256xf32>,
    %c0_27 = arith.constant 0 : index
    %c127 = arith.constant 127 : index
    %89 = vector.load %arg6[%c0_27, %c127] : memref<2x512xf32, #tpu.memory_space<vmem>>, vector<2x256xf32>
    %c3_28 = arith.constant 3 : index
    %c0_29 = arith.constant 0 : index
    %c0_30 = arith.constant 0 : index
    %90 = vector.load %arg3[%c3_28, %c0_29, %c0_30] : memref<9x1x256xf32, #tpu.memory_space<vmem>>, vector<1x1x256xf32>
    %91 = vector.shape_cast %90 : vector<1x1x256xf32> to vector<1x256xf32>
    %92 = vector.broadcast %91 : vector<1x256xf32> to vector<2x256xf32>
    %93 = arith.mulf %89, %92 : vector<2x256xf32>
    %94 = arith.addf %72, %93 : vector<2x256xf32>
    %c4 = arith.constant 4 : index
    %95 = memref.load %arg1[%c4] : memref<36xf32, #tpu.memory_space<smem>>
    %96 = vector.broadcast %95 : f32 to vector<2x256xf32>
    %97 = arith.mulf %2, %96 : vector<2x256xf32>
    %c13 = arith.constant 13 : index
    %98 = memref.load %arg1[%c13] : memref<36xf32, #tpu.memory_space<smem>>
    %99 = vector.broadcast %98 : f32 to vector<2x256xf32>
    %100 = arith.mulf %3, %99 : vector<2x256xf32>
    %101 = arith.addf %97, %100 : vector<2x256xf32>
    %c22 = arith.constant 22 : index
    %102 = memref.load %arg1[%c22] : memref<36xf32, #tpu.memory_space<smem>>
    %103 = vector.broadcast %102 : f32 to vector<2x256xf32>
    %104 = arith.mulf %4, %103 : vector<2x256xf32>
    %105 = arith.addf %101, %104 : vector<2x256xf32>
    %c31 = arith.constant 31 : index
    %106 = memref.load %arg1[%c31] : memref<36xf32, #tpu.memory_space<smem>>
    %107 = vector.broadcast %106 : f32 to vector<2x256xf32>
    %108 = arith.mulf %5, %107 : vector<2x256xf32>
    %109 = arith.addf %105, %108 : vector<2x256xf32>
    %110 = arith.addf %94, %109 : vector<2x256xf32>
    %c5 = arith.constant 5 : index
    %111 = memref.load %arg1[%c5] : memref<36xf32, #tpu.memory_space<smem>>
    %112 = vector.broadcast %111 : f32 to vector<2x256xf32>
    %113 = arith.mulf %2, %112 : vector<2x256xf32>
    %c14 = arith.constant 14 : index
    %114 = memref.load %arg1[%c14] : memref<36xf32, #tpu.memory_space<smem>>
    %115 = vector.broadcast %114 : f32 to vector<2x256xf32>
    %116 = arith.mulf %3, %115 : vector<2x256xf32>
    %117 = arith.addf %113, %116 : vector<2x256xf32>
    %c23 = arith.constant 23 : index
    %118 = memref.load %arg1[%c23] : memref<36xf32, #tpu.memory_space<smem>>
    %119 = vector.broadcast %118 : f32 to vector<2x256xf32>
    %120 = arith.mulf %4, %119 : vector<2x256xf32>
    %121 = arith.addf %117, %120 : vector<2x256xf32>
    %c32 = arith.constant 32 : index
    %122 = memref.load %arg1[%c32] : memref<36xf32, #tpu.memory_space<smem>>
    %123 = vector.broadcast %122 : f32 to vector<2x256xf32>
    %124 = arith.mulf %5, %123 : vector<2x256xf32>
    %125 = arith.addf %121, %124 : vector<2x256xf32>
    %c0_31 = arith.constant 0 : index
    %c128_32 = arith.constant 128 : index
    %126 = vector.load %arg6[%c0_31, %c128_32] : memref<2x512xf32, #tpu.memory_space<vmem>>, vector<2x256xf32>
    tpu.vector_store %arg6[%c0_31, %c128_32], %125 {strides = array<i32>} : memref<2x512xf32, #tpu.memory_space<vmem>>, vector<2x256xf32>,
    %c0_33 = arith.constant 0 : index
    %c129 = arith.constant 129 : index
    %127 = vector.load %arg6[%c0_33, %c129] : memref<2x512xf32, #tpu.memory_space<vmem>>, vector<2x256xf32>
    %c5_34 = arith.constant 5 : index
    %c0_35 = arith.constant 0 : index
    %c0_36 = arith.constant 0 : index
    %128 = vector.load %arg3[%c5_34, %c0_35, %c0_36] : memref<9x1x256xf32, #tpu.memory_space<vmem>>, vector<1x1x256xf32>
    %129 = vector.shape_cast %128 : vector<1x1x256xf32> to vector<1x256xf32>
    %130 = vector.broadcast %129 : vector<1x256xf32> to vector<2x256xf32>
    %131 = arith.mulf %127, %130 : vector<2x256xf32>
    %132 = arith.addf %110, %131 : vector<2x256xf32>
    %c6 = arith.constant 6 : index
    %133 = memref.load %arg1[%c6] : memref<36xf32, #tpu.memory_space<smem>>
    %134 = vector.broadcast %133 : f32 to vector<2x256xf32>
    %135 = arith.mulf %2, %134 : vector<2x256xf32>
    %c15 = arith.constant 15 : index
    %136 = memref.load %arg1[%c15] : memref<36xf32, #tpu.memory_space<smem>>
    %137 = vector.broadcast %136 : f32 to vector<2x256xf32>
    %138 = arith.mulf %3, %137 : vector<2x256xf32>
    %139 = arith.addf %135, %138 : vector<2x256xf32>
    %c24 = arith.constant 24 : index
    %140 = memref.load %arg1[%c24] : memref<36xf32, #tpu.memory_space<smem>>
    %141 = vector.broadcast %140 : f32 to vector<2x256xf32>
    %142 = arith.mulf %4, %141 : vector<2x256xf32>
    %143 = arith.addf %139, %142 : vector<2x256xf32>
    %c33 = arith.constant 33 : index
    %144 = memref.load %arg1[%c33] : memref<36xf32, #tpu.memory_space<smem>>
    %145 = vector.broadcast %144 : f32 to vector<2x256xf32>
    %146 = arith.mulf %5, %145 : vector<2x256xf32>
    %147 = arith.addf %143, %146 : vector<2x256xf32>
    %c0_37 = arith.constant 0 : index
    %c128_38 = arith.constant 128 : index
    %148 = vector.load %arg6[%c0_37, %c128_38] : memref<2x512xf32, #tpu.memory_space<vmem>>, vector<2x256xf32>
    tpu.vector_store %arg6[%c0_37, %c128_38], %147 {strides = array<i32>} : memref<2x512xf32, #tpu.memory_space<vmem>>, vector<2x256xf32>,
    %c0_39 = arith.constant 0 : index
    %c143 = arith.constant 143 : index
    %149 = vector.load %arg6[%c0_39, %c143] : memref<2x512xf32, #tpu.memory_space<vmem>>, vector<2x256xf32>
    %c6_40 = arith.constant 6 : index
    %c0_41 = arith.constant 0 : index
    %c0_42 = arith.constant 0 : index
    %150 = vector.load %arg3[%c6_40, %c0_41, %c0_42] : memref<9x1x256xf32, #tpu.memory_space<vmem>>, vector<1x1x256xf32>
    %151 = vector.shape_cast %150 : vector<1x1x256xf32> to vector<1x256xf32>
    %152 = vector.broadcast %151 : vector<1x256xf32> to vector<2x256xf32>
    %153 = arith.mulf %149, %152 : vector<2x256xf32>
    %154 = arith.addf %132, %153 : vector<2x256xf32>
    %c7 = arith.constant 7 : index
    %155 = memref.load %arg1[%c7] : memref<36xf32, #tpu.memory_space<smem>>
    %156 = vector.broadcast %155 : f32 to vector<2x256xf32>
    %157 = arith.mulf %2, %156 : vector<2x256xf32>
    %c16 = arith.constant 16 : index
    %158 = memref.load %arg1[%c16] : memref<36xf32, #tpu.memory_space<smem>>
    %159 = vector.broadcast %158 : f32 to vector<2x256xf32>
    %160 = arith.mulf %3, %159 : vector<2x256xf32>
    %161 = arith.addf %157, %160 : vector<2x256xf32>
    %c25 = arith.constant 25 : index
    %162 = memref.load %arg1[%c25] : memref<36xf32, #tpu.memory_space<smem>>
    %163 = vector.broadcast %162 : f32 to vector<2x256xf32>
    %164 = arith.mulf %4, %163 : vector<2x256xf32>
    %165 = arith.addf %161, %164 : vector<2x256xf32>
    %c34 = arith.constant 34 : index
    %166 = memref.load %arg1[%c34] : memref<36xf32, #tpu.memory_space<smem>>
    %167 = vector.broadcast %166 : f32 to vector<2x256xf32>
    %168 = arith.mulf %5, %167 : vector<2x256xf32>
    %169 = arith.addf %165, %168 : vector<2x256xf32>
    %c0_43 = arith.constant 0 : index
    %c128_44 = arith.constant 128 : index
    %170 = vector.load %arg6[%c0_43, %c128_44] : memref<2x512xf32, #tpu.memory_space<vmem>>, vector<2x256xf32>
    tpu.vector_store %arg6[%c0_43, %c128_44], %169 {strides = array<i32>} : memref<2x512xf32, #tpu.memory_space<vmem>>, vector<2x256xf32>,
    %c0_45 = arith.constant 0 : index
    %c144 = arith.constant 144 : index
    %171 = vector.load %arg6[%c0_45, %c144] : memref<2x512xf32, #tpu.memory_space<vmem>>, vector<2x256xf32>
    %c7_46 = arith.constant 7 : index
    %c0_47 = arith.constant 0 : index
    %c0_48 = arith.constant 0 : index
    %172 = vector.load %arg3[%c7_46, %c0_47, %c0_48] : memref<9x1x256xf32, #tpu.memory_space<vmem>>, vector<1x1x256xf32>
    %173 = vector.shape_cast %172 : vector<1x1x256xf32> to vector<1x256xf32>
    %174 = vector.broadcast %173 : vector<1x256xf32> to vector<2x256xf32>
    %175 = arith.mulf %171, %174 : vector<2x256xf32>
    %176 = arith.addf %154, %175 : vector<2x256xf32>
    %c8 = arith.constant 8 : index
    %177 = memref.load %arg1[%c8] : memref<36xf32, #tpu.memory_space<smem>>
    %178 = vector.broadcast %177 : f32 to vector<2x256xf32>
    %179 = arith.mulf %2, %178 : vector<2x256xf32>
    %c17 = arith.constant 17 : index
    %180 = memref.load %arg1[%c17] : memref<36xf32, #tpu.memory_space<smem>>
    %181 = vector.broadcast %180 : f32 to vector<2x256xf32>
    %182 = arith.mulf %3, %181 : vector<2x256xf32>
    %183 = arith.addf %179, %182 : vector<2x256xf32>
    %c26 = arith.constant 26 : index
    %184 = memref.load %arg1[%c26] : memref<36xf32, #tpu.memory_space<smem>>
    %185 = vector.broadcast %184 : f32 to vector<2x256xf32>
    %186 = arith.mulf %4, %185 : vector<2x256xf32>
    %187 = arith.addf %183, %186 : vector<2x256xf32>
    %c35 = arith.constant 35 : index
    %188 = memref.load %arg1[%c35] : memref<36xf32, #tpu.memory_space<smem>>
    %189 = vector.broadcast %188 : f32 to vector<2x256xf32>
    %190 = arith.mulf %5, %189 : vector<2x256xf32>
    %191 = arith.addf %187, %190 : vector<2x256xf32>
    %c0_49 = arith.constant 0 : index
    %c128_50 = arith.constant 128 : index
    %192 = vector.load %arg6[%c0_49, %c128_50] : memref<2x512xf32, #tpu.memory_space<vmem>>, vector<2x256xf32>
    tpu.vector_store %arg6[%c0_49, %c128_50], %191 {strides = array<i32>} : memref<2x512xf32, #tpu.memory_space<vmem>>, vector<2x256xf32>,
    %c0_51 = arith.constant 0 : index
    %c145 = arith.constant 145 : index
    %193 = vector.load %arg6[%c0_51, %c145] : memref<2x512xf32, #tpu.memory_space<vmem>>, vector<2x256xf32>
    %c8_52 = arith.constant 8 : index
    %c0_53 = arith.constant 0 : index
    %c0_54 = arith.constant 0 : index
    %194 = vector.load %arg3[%c8_52, %c0_53, %c0_54] : memref<9x1x256xf32, #tpu.memory_space<vmem>>, vector<1x1x256xf32>
    %195 = vector.shape_cast %194 : vector<1x1x256xf32> to vector<1x256xf32>
    %196 = vector.broadcast %195 : vector<1x256xf32> to vector<2x256xf32>
    %197 = arith.mulf %193, %196 : vector<2x256xf32>
    %198 = arith.addf %176, %197 : vector<2x256xf32>
    %c0_55 = arith.constant 0 : index
    %199 = memref.load %arg2[%c0_55] : memref<1xf32, #tpu.memory_space<smem>>
    %200 = vector.broadcast %199 : f32 to vector<2x256xf32>
    %201 = arith.addf %198, %200 : vector<2x256xf32>
    %202 = arith.negf %201 : vector<2x256xf32>
    %203 = math.exp %202 : vector<2x256xf32>
    %cst_56 = arith.constant 1.000000e+00 : f32
    %204 = vector.broadcast %cst_56 : f32 to vector<2x256xf32>
    %205 = arith.addf %204, %203 : vector<2x256xf32>
    %206 = arith.divf %204, %205 : vector<2x256xf32>
    %c0_57 = arith.constant 0 : index
    %c0_58 = arith.constant 0 : index
    %207 = vector.load %arg5[%c0_57, %c0_58] : memref<2x256xf32, #tpu.memory_space<vmem>>, vector<2x256xf32>
    tpu.vector_store %arg5[%c0_57, %c0_58], %206 {strides = array<i32>} : memref<2x256xf32, #tpu.memory_space<vmem>>, vector<2x256xf32>,
    return
  }
  func.func @transform_0(%arg0: i32) -> i32 {
    %c0_i32 = arith.constant 0 : i32
    %c0_i32_0 = arith.constant 0 : i32
    return %c0_i32 : i32
  }
  func.func @transform_1(%arg0: i32) -> i32 {
    %c0_i32 = arith.constant 0 : i32
    %c0_i32_0 = arith.constant 0 : i32
    return %c0_i32 : i32
  }
  func.func @transform_2(%arg0: i32) -> (i32, i32, i32) {
    %c0_i32 = arith.constant 0 : i32
    %c0_i32_0 = arith.constant 0 : i32
    %c0_i32_1 = arith.constant 0 : i32
    %c0_i32_2 = arith.constant 0 : i32
    return %c0_i32, %c0_i32_0, %c0_i32_1 : i32, i32, i32
  }
  func.func @transform_3(%arg0: i32) -> (i32, i32) {
    %c0_i32 = arith.constant 0 : i32
    %c0_i32_0 = arith.constant 0 : i32
    return %arg0, %c0_i32 : i32, i32
  }
  func.func @transform_4(%arg0: i32) -> (i32, i32) {
    %c0_i32 = arith.constant 0 : i32
    %c0_i32_0 = arith.constant 0 : i32
    return %arg0, %c0_i32 : i32, i32
  }
}

</mosaic_0001>

<llo_original>
// kernel: tpu_custom_call.1
$region0: #{tpu_custom_call.1}
  #allocation0 [shape = 'u32[]', space=smem, size = 0x4, offset = 0x4, fixed_abs, tag = 'smem constant byte address 0x4 - core index']
  #allocation1 [shape = 'u32[144,128]{1,0:T(1,128)}', space=vmem, size = 0x12000, scoped, tag = 'internal scratch']
  #allocation2 [shape = 'f32[2,512]{1,0:T(2,128)}', space=vmem, size = 0x1000, scoped, tag = 'scratch operand']
  #allocation3 [shape = 'f32[1]{0:T(128)S(6)}', space=smem, size = 0x200, scoped, tag = 'scoped memory for tpu_custom_call.1']
  %s0 = inlined_call_operand.vmem [shape: f32[36], index: 0, kind: input, shape index: {}]
  %s1 = inlined_call_operand.<no memory space> [shape: f32[1], index: 1, kind: input, shape index: {}]
  %s2 = inlined_call_operand.hbm [shape: f32[9,1,256], index: 2, kind: input, shape index: {}]
  %s3 = inlined_call_operand.hbm [shape: f32[2,1024], index: 3, kind: input, shape index: {}]
  %s4 = inlined_call_operand.hbm [shape: f32[2,256], index: 4, kind: output, shape index: {}]
  %s5 = sld [smem:[#allocation0]]
  $region38: #{tpu_custom_call.1} parent=0
    _
  %s7 = ssub.s32 1, %s5
  %s8 = scalar_select 0, %s7, %s5
  %9 = sst [smem:[#allocation3]] %s1
  $region1: #{tpu_custom_call.1} parent=0
    #allocation4 [shape = 'u8[512]{0}', space=smem, size = 0x200, scoped, tag = 'input window, operand 0, single buffered']
    #allocation5 [shape = 's32[1]{0}', space=sflag, size = 0x4, scoped, tag = 'scoped memory for tpu_custom_call.1']
    #allocation6 [shape = 's32[1]{0}', space=sflag, size = 0x4, scoped, tag = 'scoped memory for tpu_custom_call.1']
    #allocation7 [shape = 's32[1]{0}', space=sflag, size = 0x4, scoped, tag = 'scoped memory for tpu_custom_call.1']
    #allocation8 [shape = 'u8[9216]{0}', space=vmem, size = 0x2400, scoped, tag = 'input window, operand 2, single buffered']
    #allocation9 [shape = 'u8[8192]{0}', space=vmem, size = 0x2000, scoped, tag = 'input window, operand 3, single buffered']
    #allocation10 [shape = 's32[1]{0}', space=sflag, size = 0x4, scoped, tag = 'scoped memory for tpu_custom_call.1']
    #allocation11 [shape = 'u8[2048]{0}', space=vmem, size = 0x800, scoped, tag = 'output window, operand 0, single buffered']
    %10 = vsyncpa [#allocation7], 0
    %11 = vsyncpa [#allocation5], 0
    %12 = vsyncpa [#allocation10], 0
    %13 = vsyncpa [#allocation6], 0
    // Predicated region
    $region2: #{tpu_custom_call.1} parent=1 // pred_check
      _
    $region3: #{tpu_custom_call.1} parent=1 // pred_check_branch
      %15 = sbr.rel (0) target = $region5
    $region4: #{tpu_custom_call.1} parent=1 // pred_region
      %s17 = ssub.s32 16, 16
      %18 = vsyncadd [#allocation7], %s17
      %s20 = sshll.u32 %s0, 4
      %s21 = int_to_ptr.vmem [resolvable:$true] %s20
      %23 = dma.vmem_to_smem %s21, 16, [#allocation4], [#allocation7]
    $region5: #{tpu_custom_call.1} parent=1 // pred_fallthru
      _
    // Predicated region
    $region6: #{tpu_custom_call.1} parent=1 // pred_check
      _
    $region7: #{tpu_custom_call.1} parent=1 // pred_check_branch
      %25 = sbr.rel (0) target = $region9
    $region8: #{tpu_custom_call.1} parent=1 // pred_region
      _
    $region9: #{tpu_custom_call.1} parent=1 // pred_fallthru
      _
    // Predicated region
    $region10: #{tpu_custom_call.1} parent=1 // pred_check
      _
    $region11: #{tpu_custom_call.1} parent=1 // pred_check_branch
      %27 = sbr.rel (0) target = $region13
    $region12: #{tpu_custom_call.1} parent=1 // pred_region
      %s29 = ssub.s32 288, 288
      %30 = vsyncadd [#allocation5], %s29
      %s31 = sshll.u32 [#allocation8], 4
      %s32 = int_to_ptr.vmem [resolvable:$true] %s31
      %37 = dma.hbm_to_vmem [thread:$0]  %s2, 288, %s32, [#allocation5], 32, 32, 2
    $region13: #{tpu_custom_call.1} parent=1 // pred_fallthru
      _
    // Predicated region
    $region14: #{tpu_custom_call.1} parent=1 // pred_check
      _
    $region15: #{tpu_custom_call.1} parent=1 // pred_check_branch
      %39 = sbr.rel (0) target = $region17
    $region16: #{tpu_custom_call.1} parent=1 // pred_region
      %s41 = ssub.s32 256, 256
      %42 = vsyncadd [#allocation10], %s41
      %s44 = sshll.u32 [#allocation9], 4
      %s45 = int_to_ptr.vmem [resolvable:$true] %s44
      %47 = dma.hbm_to_vmem [thread:$0]  %s3, 256, %s45, [#allocation10]
    $region17: #{tpu_custom_call.1} parent=1 // pred_fallthru
      _
    // Predicated region
    $region18: #{tpu_custom_call.1} parent=1 // pred_check
      _
    $region19: #{tpu_custom_call.1} parent=1 // pred_check_branch
      %49 = sbr.rel (0) target = $region21
    $region20: #{tpu_custom_call.1} parent=1 // pred_region
      %50 = dma.done [#allocation7], 16
    $region21: #{tpu_custom_call.1} parent=1 // pred_fallthru
      _
    // Predicated region
    $region22: #{tpu_custom_call.1} parent=1 // pred_check
      _
    $region23: #{tpu_custom_call.1} parent=1 // pred_check_branch
      %52 = sbr.rel (0) target = $region25
    $region24: #{tpu_custom_call.1} parent=1 // pred_region
      %53 = dma.done [#allocation5], 288
    $region25: #{tpu_custom_call.1} parent=1 // pred_fallthru
      _
    // Predicated region
    $region26: #{tpu_custom_call.1} parent=1 // pred_check
      _
    $region27: #{tpu_custom_call.1} parent=1 // pred_check_branch
      %55 = sbr.rel (0) target = $region29
    $region28: #{tpu_custom_call.1} parent=1 // pred_region
      %56 = dma.done [#allocation10], 256
    $region29: #{tpu_custom_call.1} parent=1 // pred_fallthru
      _
    %57 = sfence
    %58 = vst [vmem:[#allocation2] sm:$0xff] 0.0
    %v59 = vld [vmem:[#allocation9] sm:$0xf]
    %v60 = vld [vmem:[#allocation9 + $0x4] sm:$0xf]
    %v61 = vld [vmem:[#allocation9 + $0x8] sm:$0xf]
    %v62 = vld [vmem:[#allocation9 + $0xc] sm:$0xf]
    %s63 = sld [smem:[#allocation4]]
    %v64 = vstv %s63
    %v65 = vmul.f32 %v59, %v64
    %s66 = sld [smem:[#allocation4 + $0x9]]
    %v67 = vstv %s66
    %v68 = vmul.f32 %v60, %v67
    %v69 = vadd.f32 %v65, %v68
    %s70 = sld [smem:[#allocation4 + $0x12]]
    %v71 = vstv %s70
    %v72 = vmul.f32 %v61, %v71
    %v73 = vadd.f32 %v69, %v72
    %s74 = sld [smem:[#allocation4 + $0x1b]]
    %v75 = vstv %s74
    %v76 = vmul.f32 %v62, %v75
    %v77 = vadd.f32 %v73, %v76
    %78 = vst [vmem:[#allocation2 + $0x2] sm:$0xf] %v77
    %v79 = vld [vmem:[#allocation2] sm:$0x3f]
    %v80 = vld [vmem:[#allocation8] sm:$0x3]
    %v82 = vlaneseq
    %v83 = vshrl.u32 %v82, 7
    %v84 = vsub.s32 0, %v83
    %v85 = vrot.slane %v80, %v84
    %v86 = vlaneseq
    %v87 = vshrl.u32 %v86, 7
    %v88 = vsub.s32 1, %v87
    %v89 = vrot.slane %v80, %v88
    %v90 = vcombine.low %v85, %v89
    %v92 = vunpack.c.l.s4 1983009808
    %v93 = vunpack.c.0.s8 %v92
    %v94 = vlaneseq
    %v95 = vshrl.u32 %v94, 7
    %v96 = vsub.s32 %v93, %v95
    %v97 = vrot.slane %v90, %v96
    %98 = vrot.lane.b32.xlu0 %v97, 111
    %v99 = vpop.permute.xlu0 %98
    %v100 = vrot.slane %v99, 6
    %vm101 = vcmask 908288
    %v102 = vsel %vm101, %v100, %v99
    %v104 = vmul.f32 %v79, %v102
    %v105 = vadd.f32 %v104, 0.0
    %s106 = sld [smem:[#allocation4 + $0x1]]
    %v107 = vstv %s106
    %v108 = vmul.f32 %v59, %v107
    %s109 = sld [smem:[#allocation4 + $0xa]]
    %v110 = vstv %s109
    %v111 = vmul.f32 %v60, %v110
    %v112 = vadd.f32 %v108, %v111
    %s113 = sld [smem:[#allocation4 + $0x13]]
    %v114 = vstv %s113
    %v115 = vmul.f32 %v61, %v114
    %v116 = vadd.f32 %v112, %v115
    %s117 = sld [smem:[#allocation4 + $0x1c]]
    %v118 = vstv %s117
    %v119 = vmul.f32 %v62, %v118
    %v120 = vadd.f32 %v116, %v119
    %121 = vst [vmem:[#allocation2 + $0x2] sm:$0xf] %v120
    %v122 = vld [vmem:[#allocation2] sm:$0x3f]
    %s123 = scalar_lea.vmem [#allocation8], 2
    %v124 = vld [vmem:[%s123] sm:$0x3]
    %v126 = vlaneseq
    %v127 = vshrl.u32 %v126, 7
    %v128 = vsub.s32 0, %v127
    %v129 = vrot.slane %v124, %v128
    %v130 = vlaneseq
    %v131 = vshrl.u32 %v130, 7
    %v132 = vsub.s32 1, %v131
    %v133 = vrot.slane %v124, %v132
    %v134 = vcombine.low %v129, %v133
    %v136 = vunpack.c.l.s4 1983009808
    %v137 = vunpack.c.0.s8 %v136
    %v138 = vlaneseq
    %v139 = vshrl.u32 %v138, 7
    %v140 = vsub.s32 %v137, %v139
    %v141 = vrot.slane %v134, %v140
    %142 = vrot.lane.b32.xlu0 %v141, 112
    %v143 = vpop.permute.xlu0 %142
    %v144 = vrot.slane %v143, 6
    %vm145 = vcmask 916480
    %v146 = vsel %vm145, %v144, %v143
    %v148 = vmul.f32 %v122, %v146
    %150 = vrot.lane.b32.xlu0 %v148, 127
    %v151 = vpop.permute.xlu0 %150
    %v152 = vrot.slane %v151, 2
    %vm153 = vcmask 1039360
    %v154 = vsel %vm153, %v151, %v152
    %v156 = vadd.f32 %v105, %v154
    %s157 = sld [smem:[#allocation4 + $0x2]]
    %v158 = vstv %s157
    %v159 = vmul.f32 %v59, %v158
    %s160 = sld [smem:[#allocation4 + $0xb]]
    %v161 = vstv %s160
    %v162 = vmul.f32 %v60, %v161
    %v163 = vadd.f32 %v159, %v162
    %s164 = sld [smem:[#allocation4 + $0x14]]
    %v165 = vstv %s164
    %v166 = vmul.f32 %v61, %v165
    %v167 = vadd.f32 %v163, %v166
    %s168 = sld [smem:[#allocation4 + $0x1d]]
    %v169 = vstv %s168
    %v170 = vmul.f32 %v62, %v169
    %v171 = vadd.f32 %v167, %v170
    %172 = vst [vmem:[#allocation2 + $0x2] sm:$0xf] %v171
    %v173 = vld [vmem:[#allocation2] sm:$0x3f]
    %s174 = scalar_lea.vmem [#allocation8], 4
    %v175 = vld [vmem:[%s174] sm:$0x3]
    %v177 = vlaneseq
    %v178 = vshrl.u32 %v177, 7
    %v179 = vsub.s32 0, %v178
    %v180 = vrot.slane %v175, %v179
    %v181 = vlaneseq
    %v182 = vshrl.u32 %v181, 7
    %v183 = vsub.s32 1, %v182
    %v184 = vrot.slane %v175, %v183
    %v185 = vcombine.low %v180, %v184
    %v187 = vunpack.c.l.s4 1983009808
    %v188 = vunpack.c.0.s8 %v187
    %v189 = vlaneseq
    %v190 = vshrl.u32 %v189, 7
    %v191 = vsub.s32 %v188, %v190
    %v192 = vrot.slane %v185, %v191
    %193 = vrot.lane.b32.xlu0 %v192, 113
    %v194 = vpop.permute.xlu0 %193
    %v195 = vrot.slane %v194, 6
    %vm196 = vcmask 924672
    %v197 = vsel %vm196, %v195, %v194
    %v199 = vmul.f32 %v173, %v197
    %201 = vrot.lane.b32.xlu0 %v199, 126
    %v202 = vpop.permute.xlu0 %201
    %v203 = vrot.slane %v202, 2
    %vm204 = vcmask 1031168
    %v205 = vsel %vm204, %v202, %v203
    %v207 = vadd.f32 %v156, %v205
    %s208 = sld [smem:[#allocation4 + $0x3]]
    %v209 = vstv %s208
    %v210 = vmul.f32 %v59, %v209
    %s211 = sld [smem:[#allocation4 + $0xc]]
    %v212 = vstv %s211
    %v213 = vmul.f32 %v60, %v212
    %v214 = vadd.f32 %v210, %v213
    %s215 = sld [smem:[#allocation4 + $0x15]]
    %v216 = vstv %s215
    %v217 = vmul.f32 %v61, %v216
    %v218 = vadd.f32 %v214, %v217
    %s219 = sld [smem:[#allocation4 + $0x1e]]
    %v220 = vstv %s219
    %v221 = vmul.f32 %v62, %v220
    %v222 = vadd.f32 %v218, %v221
    %223 = vst [vmem:[#allocation2 + $0x2] sm:$0xf] %v222
    %v224 = vld [vmem:[#allocation2] sm:$0x3f]
    %s225 = scalar_lea.vmem [#allocation8], 6
    %v226 = vld [vmem:[%s225] sm:$0x3]
    %v228 = vlaneseq
    %v229 = vshrl.u32 %v228, 7
    %v230 = vsub.s32 0, %v229
    %v231 = vrot.slane %v226, %v230
    %v232 = vlaneseq
    %v233 = vshrl.u32 %v232, 7
    %v234 = vsub.s32 1, %v233
    %v235 = vrot.slane %v226, %v234
    %v236 = vcombine.low %v231, %v235
    %v238 = vunpack.c.l.s4 1983009808
    %v239 = vunpack.c.0.s8 %v238
    %v240 = vlaneseq
    %v241 = vshrl.u32 %v240, 7
    %v242 = vsub.s32 %v239, %v241
    %v243 = vrot.slane %v236, %v242
    %244 = vrot.lane.b32.xlu0 %v243, 127
    %v245 = vpop.permute.xlu0 %244
    %v246 = vrot.slane %v245, 6
    %v247 = vsel %vm153, %v246, %v245
    %v249 = vmul.f32 %v224, %v247
    %251 = vrot.lane.b32.xlu0 %v249, 112
    %v252 = vpop.permute.xlu0 %251
    %v253 = vrot.slane %v252, 2
    %v254 = vsel %vm145, %v252, %v253
    %v256 = vadd.f32 %v207, %v254
    %s257 = sld [smem:[#allocation4 + $0x4]]
    %v258 = vstv %s257
    %v259 = vmul.f32 %v59, %v258
    %s260 = sld [smem:[#allocation4 + $0xd]]
    %v261 = vstv %s260
    %v262 = vmul.f32 %v60, %v261
    %v263 = vadd.f32 %v259, %v262
    %s264 = sld [smem:[#allocation4 + $0x16]]
    %v265 = vstv %s264
    %v266 = vmul.f32 %v61, %v265
    %v267 = vadd.f32 %v263, %v266
    %s268 = sld [smem:[#allocation4 + $0x1f]]
    %v269 = vstv %s268
    %v270 = vmul.f32 %v62, %v269
    %v271 = vadd.f32 %v267, %v270
    %273 = vrot.lane.b32.xlu0 %v271, 111
    %v274 = vpop.permute.xlu0 %273
    %v275 = vrot.slane %v274, 6
    %v276 = vsel %vm101, %v275, %v274
    %v278 = vadd.f32 %v256, %v276
    %s279 = sld [smem:[#allocation4 + $0x5]]
    %v280 = vstv %s279
    %v281 = vmul.f32 %v59, %v280
    %s282 = sld [smem:[#allocation4 + $0xe]]
    %v283 = vstv %s282
    %v284 = vmul.f32 %v60, %v283
    %v285 = vadd.f32 %v281, %v284
    %s286 = sld [smem:[#allocation4 + $0x17]]
    %v287 = vstv %s286
    %v288 = vmul.f32 %v61, %v287
    %v289 = vadd.f32 %v285, %v288
    %s290 = sld [smem:[#allocation4 + $0x20]]
    %v291 = vstv %s290
    %v292 = vmul.f32 %v62, %v291
    %v293 = vadd.f32 %v289, %v292
    %294 = vst [vmem:[#allocation2 + $0x2] sm:$0xf] %v293
    %v295 = vld [vmem:[#allocation2 + $0x2] sm:$0x3f]
    %s296 = scalar_lea.vmem [#allocation8], 10
    %v297 = vld [vmem:[%s296] sm:$0x3]
    %v299 = vlaneseq
    %v300 = vshrl.u32 %v299, 7
    %v301 = vsub.s32 0, %v300
    %v302 = vrot.slane %v297, %v301
    %v303 = vlaneseq
    %v304 = vshrl.u32 %v303, 7
    %v305 = vsub.s32 1, %v304
    %v306 = vrot.slane %v297, %v305
    %v307 = vcombine.low %v302, %v306
    %v309 = vunpack.c.l.s4 1983009808
    %v310 = vunpack.c.0.s8 %v309
    %v311 = vlaneseq
    %v312 = vshrl.u32 %v311, 7
    %v313 = vsub.s32 %v310, %v312
    %v314 = vrot.slane %v307, %v313
    %315 = vrot.lane.b32.xlu0 %v314, 1
    %v316 = vpop.permute.xlu0 %315
    %v317 = vrot.slane %v316, 6
    %vm318 = vcmask 7168
    %v319 = vsel %vm318, %v317, %v316
    %v321 = vmul.f32 %v295, %v319
    %323 = vrot.lane.b32.xlu0 %v321, 110
    %v324 = vpop.permute.xlu0 %323
    %v325 = vrot.slane %v324, 6
    %vm326 = vcmask 900096
    %v327 = vsel %vm326, %v325, %v324
    %v329 = vadd.f32 %v278, %v327
    %s330 = sld [smem:[#allocation4 + $0x6]]
    %v331 = vstv %s330
    %v332 = vmul.f32 %v59, %v331
    %s333 = sld [smem:[#allocation4 + $0xf]]
    %v334 = vstv %s333
    %v335 = vmul.f32 %v60, %v334
    %v336 = vadd.f32 %v332, %v335
    %s337 = sld [smem:[#allocation4 + $0x18]]
    %v338 = vstv %s337
    %v339 = vmul.f32 %v61, %v338
    %v340 = vadd.f32 %v336, %v339
    %s341 = sld [smem:[#allocation4 + $0x21]]
    %v342 = vstv %s341
    %v343 = vmul.f32 %v62, %v342
    %v344 = vadd.f32 %v340, %v343
    %345 = vst [vmem:[#allocation2 + $0x2] sm:$0xf] %v344
    %v346 = vld [vmem:[#allocation2 + $0x2] sm:$0x3f]
    %s347 = scalar_lea.vmem [#allocation8], 12
    %v348 = vld [vmem:[%s347] sm:$0x3]
    %v350 = vlaneseq
    %v351 = vshrl.u32 %v350, 7
    %v352 = vsub.s32 0, %v351
    %v353 = vrot.slane %v348, %v352
    %v354 = vlaneseq
    %v355 = vshrl.u32 %v354, 7
    %v356 = vsub.s32 1, %v355
    %v357 = vrot.slane %v348, %v356
    %v358 = vcombine.low %v353, %v357
    %v360 = vunpack.c.l.s4 1983009808
    %v361 = vunpack.c.0.s8 %v360
    %v362 = vlaneseq
    %v363 = vshrl.u32 %v362, 7
    %v364 = vsub.s32 %v361, %v363
    %v365 = vrot.slane %v358, %v364
    %366 = vrot.lane.b32.xlu0 %v365, 15
    %v367 = vpop.permute.xlu0 %366
    %v368 = vrot.slane %v367, 6
    %vm369 = vcmask 121856
    %v370 = vsel %vm369, %v368, %v367
    %v372 = vmul.f32 %v346, %v370
    %374 = vrot.lane.b32.xlu0 %v372, 96
    %v375 = vpop.permute.xlu0 %374
    %v376 = vrot.slane %v375, 6
    %vm377 = vcmask 785408
    %v378 = vsel %vm377, %v376, %v375
    %v380 = vadd.f32 %v329, %v378
    %s381 = sld [smem:[#allocation4 + $0x7]]
    %v382 = vstv %s381
    %v383 = vmul.f32 %v59, %v382
    %s384 = sld [smem:[#allocation4 + $0x10]]
    %v385 = vstv %s384
    %v386 = vmul.f32 %v60, %v385
    %v387 = vadd.f32 %v383, %v386
    %s388 = sld [smem:[#allocation4 + $0x19]]
    %v389 = vstv %s388
    %v390 = vmul.f32 %v61, %v389
    %v391 = vadd.f32 %v387, %v390
    %s392 = sld [smem:[#allocation4 + $0x22]]
    %v393 = vstv %s392
    %v394 = vmul.f32 %v62, %v393
    %v395 = vadd.f32 %v391, %v394
    %396 = vst [vmem:[#allocation2 + $0x2] sm:$0xf] %v395
    %v397 = vld [vmem:[#allocation2 + $0x2] sm:$0x3f]
    %s398 = scalar_lea.vmem [#allocation8], 14
    %v399 = vld [vmem:[%s398] sm:$0x3]
    %v401 = vlaneseq
    %v402 = vshrl.u32 %v401, 7
    %v403 = vsub.s32 0, %v402
    %v404 = vrot.slane %v399, %v403
    %v405 = vlaneseq
    %v406 = vshrl.u32 %v405, 7
    %v407 = vsub.s32 1, %v406
    %v408 = vrot.slane %v399, %v407
    %v409 = vcombine.low %v404, %v408
    %v411 = vunpack.c.l.s4 1983009808
    %v412 = vunpack.c.0.s8 %v411
    %v413 = vlaneseq
    %v414 = vshrl.u32 %v413, 7
    %v415 = vsub.s32 %v412, %v414
    %v416 = vrot.slane %v409, %v415
    %417 = vrot.lane.b32.xlu0 %v416, 16
    %v418 = vpop.permute.xlu0 %417
    %v419 = vrot.slane %v418, 6
    %vm420 = vcmask 130048
    %v421 = vsel %vm420, %v419, %v418
    %v423 = vmul.f32 %v397, %v421
    %425 = vrot.lane.b32.xlu0 %v423, 95
    %v426 = vpop.permute.xlu0 %425
    %v427 = vrot.slane %v426, 6
    %vm428 = vcmask 777216
    %v429 = vsel %vm428, %v427, %v426
    %v431 = vadd.f32 %v380, %v429
    %s432 = sld [smem:[#allocation4 + $0x8]]
    %v433 = vstv %s432
    %v434 = vmul.f32 %v59, %v433
    %s435 = sld [smem:[#allocation4 + $0x11]]
    %v436 = vstv %s435
    %v437 = vmul.f32 %v60, %v436
    %v438 = vadd.f32 %v434, %v437
    %s439 = sld [smem:[#allocation4 + $0x1a]]
    %v440 = vstv %s439
    %v441 = vmul.f32 %v61, %v440
    %v442 = vadd.f32 %v438, %v441
    %s443 = sld [smem:[#allocation4 + $0x23]]
    %v444 = vstv %s443
    %v445 = vmul.f32 %v62, %v444
    %v446 = vadd.f32 %v442, %v445
    %447 = vst [vmem:[#allocation2 + $0x2] sm:$0xf] %v446
    %v448 = vld [vmem:[#allocation2 + $0x2] sm:$0x3f]
    %s449 = scalar_lea.vmem [#allocation8], 16
    %v450 = vld [vmem:[%s449] sm:$0x3]
    %v452 = vlaneseq
    %v453 = vshrl.u32 %v452, 7
    %v454 = vsub.s32 0, %v453
    %v455 = vrot.slane %v450, %v454
    %v456 = vlaneseq
    %v457 = vshrl.u32 %v456, 7
    %v458 = vsub.s32 1, %v457
    %v459 = vrot.slane %v450, %v458
    %v460 = vcombine.low %v455, %v459
    %v462 = vunpack.c.l.s4 1983009808
    %v463 = vunpack.c.0.s8 %v462
    %v464 = vlaneseq
    %v465 = vshrl.u32 %v464, 7
    %v466 = vsub.s32 %v463, %v465
    %v467 = vrot.slane %v460, %v466
    %468 = vrot.lane.b32.xlu0 %v467, 17
    %v469 = vpop.permute.xlu0 %468
    %v470 = vrot.slane %v469, 6
    %vm471 = vcmask 138240
    %v472 = vsel %vm471, %v470, %v469
    %v474 = vmul.f32 %v448, %v472
    %476 = vrot.lane.b32.xlu0 %v474, 94
    %v477 = vpop.permute.xlu0 %476
    %v478 = vrot.slane %v477, 6
    %vm479 = vcmask 769024
    %v480 = vsel %vm479, %v478, %v477
    %v482 = vadd.f32 %v431, %v480
    %s483 = sld [smem:[#allocation3]]
    %v484 = vstv %s483
    %v485 = vadd.f32 %v482, %v484
    %v486 = vxor.u32 %v485, 2147483648
    %v487 = vmul.f32 %v486, 1.442695
    %v488 = vpow.pop %v487
    %v489 = vadd.f32 %v488, 1.0
    %v490 = vrcp.pop %v489
    %v491 = vmul.f32 1.0, %v490
    %493 = vrot.lane.b32.xlu0 %v491, 17
    %v494 = vpop.permute.xlu0 %493
    %v495 = vrot.slane %v494, 2
    %v496 = vsel %vm471, %v494, %v495
    %498 = vst [vmem:[#allocation11] sm:$0xf] %v496
    // Predicated region
    $region30: #{tpu_custom_call.1} parent=1 // pred_check
      _
    $region31: #{tpu_custom_call.1} parent=1 // pred_check_branch
      %500 = sbr.rel (0) target = $region33
    $region32: #{tpu_custom_call.1} parent=1 // pred_region
      %s502 = ssub.s32 64, 64
      %503 = vsyncadd [#allocation6], %s502
      %s505 = sshll.u32 [#allocation11], 4
      %s506 = int_to_ptr.vmem [resolvable:$true] %s505
      %508 = dma.vmem_to_hbm [thread:$0]  %s506, 64, %s4, [#allocation6]
    $region33: #{tpu_custom_call.1} parent=1 // pred_fallthru
      _
    // Predicated region
    $region34: #{tpu_custom_call.1} parent=1 // pred_check
      _
    $region35: #{tpu_custom_call.1} parent=1 // pred_check_branch
      %510 = sbr.rel (0) target = $region37
    $region36: #{tpu_custom_call.1} parent=1 // pred_region
      %511 = dma.done [#allocation6], 64
    $region37: #{tpu_custom_call.1} parent=1 // pred_fallthru
      _
    %512 = vsyncpa [#allocation5], 1
    %513 = vsyncpa [#allocation10], 1
    %514 = vsyncpa [#allocation6], 1
    %515 = vsyncpa [#allocation7], 1

</llo_original>
